<compile_context>
chip_gen: v5e
topology: v5e:2x2
jax: 0.10.0
libtpu: 0.0.40
codegen_flags: <defaults>
</compile_context>

<pallas_src>
import functools

import jax
import jax.numpy as jnp
from jax.experimental import pallas as pl
from jax.experimental.pallas import tpu as pltpu


# ----------------------------------------------------------------------------
# helpers
# ----------------------------------------------------------------------------
def _activate(x, act):
    if act == "identity":
        return x
    elif act == "relu":
        return jnp.maximum(x, 0)
    elif act == "tanh":
        return jnp.tanh(x)
    elif act == "sigmoid":
        return jax.nn.sigmoid(x)
    else:
        raise ValueError("unknown activation " + act)


def _round_up(x, m):
    return ((x + m - 1) // m) * m


def _vmem_capacity_bytes():
    try:
        return int(pltpu.get_tpu_info().vmem_capacity_bytes)
    except Exception:
        return 64 * 2**20   # conservative default (v7x per-TC VMEM)


# ----------------------------------------------------------------------------
# kernel
# ----------------------------------------------------------------------------
def _mlp_kernel(*refs, num_layers, activation, compute_dtype):
    # refs = (x_ref, w0, b0, w1, b1, ..., w_{L-1}, b_{L-1}, o_ref)
    x_ref = refs[0]
    o_ref = refs[-1]
    param_refs = refs[1:-1]

    c_dt = jnp.dtype(compute_dtype)
    # Cast to compute dtype in-kernel (free if already matching; avoids a
    # separate wrapper-side pad/cast pass over x when shapes are aligned).
    h = x_ref[...].astype(c_dt)
    for layer in range(num_layers):
        w = param_refs[2 * layer][...]                      # (in_p, out_p), compute dtype
        b = param_refs[2 * layer + 1][...]                  # (1, out_p), f32
        acc = jnp.dot(h, w, preferred_element_type=jnp.float32) + b
        if layer != num_layers - 1:
            if activation == "relu" and c_dt != jnp.dtype(jnp.float32):
                # relu commutes exactly with the downcast -> do max in bf16,
                # halving VPU / store work for the activation pass.
                h = jnp.maximum(acc.astype(c_dt), 0)
            else:
                h = _activate(acc, activation).astype(c_dt)
        else:
            h = acc
    o_ref[...] = h.astype(o_ref.dtype)


# ----------------------------------------------------------------------------
# wrapper
# ----------------------------------------------------------------------------
def mlp_forward(x, weights, biases, activation="relu",
                compute_dtype=jnp.bfloat16):
    """x: (B, N). weights[i]: (in_i, out_i) (== torch weight.T). biases[i]: (out_i,)."""
    num_layers = len(weights)
    B, N = x.shape
    C = weights[-1].shape[1]
    out_dtype = x.dtype
    c_dt = jnp.dtype(compute_dtype)
    c_itemsize = c_dt.itemsize
    x_itemsize = jnp.dtype(x.dtype).itemsize
    o_itemsize = jnp.dtype(out_dtype).itemsize

    # ---- padded feature dims (lane-dense: multiples of 128) -----------------
    dims = [N] + [w.shape[1] for w in weights]              # [N, H0, ..., C]
    dims_p = [_round_up(d, 128) for d in dims]
    N_pad, C_pad = dims_p[0], dims_p[-1]

    # ---- generation-aware VMEM budget & batch tile ---------------------------
    vmem_cap = _vmem_capacity_bytes()
    vmem_budget = int(0.8 * vmem_cap)                       # leave headroom
    sub = 16 if c_itemsize == 2 else 8                      # sublane granularity
    tb_cap = 512 if vmem_cap >= 96 * 2**20 else 256         # smaller tile on 64 MiB chips

    # Target >= 2 grid steps so the batch axis can shard across both
    # TensorCores on v7x (and amortize per-step overhead when B is large).
    steps = max(2, -(-B // tb_cap))
    TB = min(tb_cap, max(sub, _round_up(-(-B // steps), sub)))

    def _footprint(tb):
        # weights/biases resident exactly once (Buffered(1))
        resident = (sum(dims_p[i] * dims_p[i + 1] * c_itemsize
                        for i in range(num_layers))
                    + sum(dims_p[i + 1] * 4 for i in range(num_layers)))
        io_dbuf = 2 * (tb * N_pad * max(c_itemsize, x_itemsize)
                       + tb * C_pad * o_itemsize)
        inter = 2 * tb * max(dims_p) * (4 + c_itemsize)     # f32 acc + bf16 hidden
        return resident, resident + io_dbuf + inter

    resident, needed = _footprint(TB)
    while needed > vmem_budget and TB > sub:
        TB = max(sub, _round_up(TB // 2, sub))
        resident, needed = _footprint(TB)
    # TODO(synk): if a single padded weight (+ the (TB, max_dim) f32
    # intermediate) still exceeds the VMEM budget, add a reduction grid axis
    # over weight tiles kept in HBM (memory_space=pl.ANY) with a
    # pl.when-guarded accumulator ("arbitrary" axis); threshold is half as
    # large on v7x (64 MiB/TC).

    B_pad = _round_up(B, TB)

    # ---- x: skip wrapper-side padding when already aligned ------------------
    if B_pad == B and N_pad == N:
        x_in = x                                            # cast in-kernel
    else:
        x_in = jnp.zeros((B_pad, N_pad), c_dt).at[:B, :N].set(x.astype(c_dt))

    # ---- weights / biases: pad+cast only when necessary ---------------------
    # TODO(synk): cache padded/bf16 weights across calls in a training loop
    # instead of rebuilding them every forward.
    w_pads, b_pads = [], []
    for li, (w, b) in enumerate(zip(weights, biases)):
        in_d, out_d = w.shape
        in_p, out_p = dims_p[li], dims_p[li + 1]
        if (in_d, out_d) == (in_p, out_p) and w.dtype == c_dt:
            w_p = w
        else:
            w_p = jnp.zeros((in_p, out_p), c_dt).at[:in_d, :out_d].set(w.astype(c_dt))
        if out_d == out_p and b.dtype == jnp.dtype(jnp.float32):
            b_p = b.reshape(1, out_p)
        else:
            b_p = jnp.zeros((1, out_p), jnp.float32).at[0, :out_d].set(
                b.astype(jnp.float32))
        w_pads.append(w_p)
        b_pads.append(b_p)

    # ---- block specs ---------------------------------------------------------
    def _build_specs(single_buffer_params):
        in_specs = [pl.BlockSpec((TB, N_pad), lambda i: (i, 0))]
        for w_p, b_p in zip(w_pads, b_pads):
            if single_buffer_params:
                # grid-invariant -> keep exactly one resident copy in VMEM
                in_specs.append(pl.BlockSpec(w_p.shape, lambda i: (0, 0),
                                             pipeline_mode=pl.Buffered(1)))
                in_specs.append(pl.BlockSpec(b_p.shape, lambda i: (0, 0),
                                             pipeline_mode=pl.Buffered(1)))
            else:
                in_specs.append(pl.BlockSpec(w_p.shape, lambda i: (0, 0)))
                in_specs.append(pl.BlockSpec(b_p.shape, lambda i: (0, 0)))
        out_spec = pl.BlockSpec((TB, C_pad), lambda i: (i, 0))
        return in_specs, out_spec

    args = [x_in]
    for w_p, b_p in zip(w_pads, b_pads):
        args.append(w_p)
        args.append(b_p)

    # ---- VMEM limit / cost estimate ------------------------------------------
    vmem_limit = int(min(vmem_budget, max(needed + (4 << 20), 16 << 20)))

    flops = 2 * B_pad * sum(dims_p[i] * dims_p[i + 1] for i in range(num_layers))
    bytes_accessed = (B_pad * N_pad * max(c_itemsize, x_itemsize) + resident
                      + B_pad * C_pad * o_itemsize)
    cost = pl.CostEstimate(flops=flops, transcendentals=0,
                           bytes_accessed=bytes_accessed)

    kernel = functools.partial(
        _mlp_kernel, num_layers=num_layers, activation=activation,
        compute_dtype=compute_dtype)

    def _call(single_buffer_params):
        in_specs, out_spec = _build_specs(single_buffer_params)
        return pl.pallas_call(
            kernel,
            out_shape=jax.ShapeDtypeStruct((B_pad, C_pad), out_dtype),
            grid=(B_pad // TB,),
            in_specs=in_specs,
            out_specs=out_spec,
            compiler_params=pltpu.CompilerParams(
                dimension_semantics=("parallel",),
                vmem_limit_bytes=vmem_limit),
            cost_estimate=cost,
        )(*args)

    try:
        out_p = _call(single_buffer_params=True)
    except Exception:
        # Fallback for jax versions where Buffered(1) on a grid-invariant
        # input is rejected: accept default double-buffering.
        out_p = _call(single_buffer_params=False)

    return out_p[:B, :C]


# ----------------------------------------------------------------------------
# init + references
# ----------------------------------------------------------------------------
def init_mlp_params(key, N, Hs, C):
    """PyTorch nn.Linear-style init (uniform +/- 1/sqrt(fan_in)); W stored (in, out)."""
    Hs = list(Hs) if hasattr(Hs, "__iter__") else [Hs]
    dims = [N] + Hs + [C]
    weights, biases = [], []
    for i in range(len(dims) - 1):
        fan_in, fan_out = dims[i], dims[i + 1]
        key, kw, kb = jax.random.split(key, 3)
        bound = 1.0 / jnp.sqrt(fan_in)
        w = jax.random.uniform(kw, (fan_in, fan_out), jnp.float32, -bound, bound)
        b = jax.random.uniform(kb, (fan_out,), jnp.float32, -bound, bound)
        weights.append(w)
        biases.append(b)
    return weights, biases


def mlp_reference_f32(x, weights, biases, activation="relu"):
    h = x
    for i, (w, b) in enumerate(zip(weights, biases)):
        h = h @ w + b
        if i != len(weights) - 1:
            h = _activate(h, activation)
    return h


def mlp_reference_mixed(x, weights, biases, activation="relu",
                        compute_dtype=jnp.bfloat16):
    """Mirrors the kernel's bf16-matmul / f32-accumulate numerics."""
    h = x
    for i, (w, b) in enumerate(zip(weights, biases)):
        acc = jnp.dot(h.astype(compute_dtype), w.astype(compute_dtype),
                      preferred_element_type=jnp.float32) + b.astype(jnp.float32)
        if i != len(weights) - 1:
            acc = _activate(acc, activation)
        h = acc
    return h.astype(x.dtype)


# ----------------------------------------------------------------------------
if __name__ == "__main__":
    key = jax.random.PRNGKey(0)
    B, N, Hs, C = 8, 32, [64, 48], 16
    activation = "relu"

    key, kx = jax.random.split(key)
    x = jax.random.normal(kx, (B, N), jnp.float32)
    weights, biases = init_mlp_params(key, N, Hs, C)

    out = mlp_forward(x, weights, biases, activation=activation)
    out = jax.block_until_ready(out)
    assert out.shape == (B, C)

    # Exact-numerics reference (same bf16-in / f32-accumulate recipe).
    ref_mixed = mlp_reference_mixed(x, weights, biases, activation=activation)
    assert jnp.allclose(out, ref_mixed, atol=2e-3, rtol=2e-3), \
        "mismatch vs mixed-precision reference"

    # Semantics sanity check vs full-f32 torch-equivalent math.
    ref_f32 = mlp_reference_f32(x, weights, biases, activation=activation)
    assert jnp.allclose(out, ref_f32, atol=5e-2, rtol=5e-2), \
        "mismatch vs f32 reference"

    # compute_dtype=float32 escape hatch: exact PyTorch numerics.
    out_f32 = mlp_forward(x, weights, biases, activation=activation,
                          compute_dtype=jnp.float32)
    out_f32 = jax.block_until_ready(out_f32)
    assert jnp.allclose(out_f32, ref_f32, atol=1e-5, rtol=1e-5), \
        "f32 compute_dtype mismatch vs f32 reference"

    print("KERNEL_OK")
</pallas_src>

<mosaic_0001>
module attributes {stable_mosaic.version = 11 : i64} {
  func.func @_mlp_kernel(%arg0: i32, %arg1: memref<16x128xbf16, #tpu.memory_space<vmem>>, %arg2: memref<128x128xbf16, #tpu.memory_space<vmem>>, %arg3: memref<1x128xf32, #tpu.memory_space<vmem>>, %arg4: memref<128x128xbf16, #tpu.memory_space<vmem>>, %arg5: memref<1x128xf32, #tpu.memory_space<vmem>>, %arg6: memref<128x128xbf16, #tpu.memory_space<vmem>>, %arg7: memref<1x128xf32, #tpu.memory_space<vmem>>, %arg8: memref<16x128xf32, #tpu.memory_space<vmem>>) attributes {dimension_semantics = [#tpu.dimension_semantics<parallel>], iteration_bounds = array<i64: 1>, scalar_prefetch = 0 : i64, scratch_operands = 0 : i64, tpu.core_type = #tpu.core_type<tc>, window_params = [{transform_indices = @transform_0, window_bounds = array<i64: 16, 128>}, {pipeline_mode = #tpu.pipeline_mode<synchronous>, transform_indices = @transform_1, window_bounds = array<i64: 128, 128>}, {pipeline_mode = #tpu.pipeline_mode<synchronous>, transform_indices = @transform_2, window_bounds = array<i64: 1, 128>}, {pipeline_mode = #tpu.pipeline_mode<synchronous>, transform_indices = @transform_3, window_bounds = array<i64: 128, 128>}, {pipeline_mode = #tpu.pipeline_mode<synchronous>, transform_indices = @transform_4, window_bounds = array<i64: 1, 128>}, {pipeline_mode = #tpu.pipeline_mode<synchronous>, transform_indices = @transform_5, window_bounds = array<i64: 128, 128>}, {pipeline_mode = #tpu.pipeline_mode<synchronous>, transform_indices = @transform_6, window_bounds = array<i64: 1, 128>}, {transform_indices = @transform_7, window_bounds = array<i64: 16, 128>}]} {
    %c0 = arith.constant 0 : index
    %c0_0 = arith.constant 0 : index
    %0 = vector.load %arg1[%c0, %c0_0] : memref<16x128xbf16, #tpu.memory_space<vmem>>, vector<16x128xbf16>
    %c0_1 = arith.constant 0 : index
    %c0_2 = arith.constant 0 : index
    %1 = vector.load %arg2[%c0_1, %c0_2] : memref<128x128xbf16, #tpu.memory_space<vmem>>, vector<128x128xbf16>
    %c0_3 = arith.constant 0 : index
    %c0_4 = arith.constant 0 : index
    %2 = vector.load %arg3[%c0_3, %c0_4] : memref<1x128xf32, #tpu.memory_space<vmem>>, vector<1x128xf32>
    %cst = arith.constant dense<0.000000e+00> : vector<16x128xf32>
    %3 = tpu.matmul %0, %1, %cst {dimension_numbers = #tpu.dot_dimension_numbers<[1], [0], [0], [1], [0, 0, 1, 1], [], []>} : vector<16x128xbf16>, vector<128x128xbf16>, vector<16x128xf32> -> vector<16x128xf32>
    %4 = vector.broadcast %2 : vector<1x128xf32> to vector<16x128xf32>
    %5 = arith.addf %3, %4 : vector<16x128xf32>
    %6 = arith.truncf %5 : vector<16x128xf32> to vector<16x128xbf16>
    %cst_5 = arith.constant 0.000000e+00 : bf16
    %7 = vector.broadcast %cst_5 : bf16 to vector<16x128xbf16>
    %8 = arith.maximumf %6, %7 : vector<16x128xbf16>
    %c0_6 = arith.constant 0 : index
    %c0_7 = arith.constant 0 : index
    %9 = vector.load %arg4[%c0_6, %c0_7] : memref<128x128xbf16, #tpu.memory_space<vmem>>, vector<128x128xbf16>
    %c0_8 = arith.constant 0 : index
    %c0_9 = arith.constant 0 : index
    %10 = vector.load %arg5[%c0_8, %c0_9] : memref<1x128xf32, #tpu.memory_space<vmem>>, vector<1x128xf32>
    %cst_10 = arith.constant dense<0.000000e+00> : vector<16x128xf32>
    %11 = tpu.matmul %8, %9, %cst_10 {dimension_numbers = #tpu.dot_dimension_numbers<[1], [0], [0], [1], [0, 0, 1, 1], [], []>} : vector<16x128xbf16>, vector<128x128xbf16>, vector<16x128xf32> -> vector<16x128xf32>
    %12 = vector.broadcast %10 : vector<1x128xf32> to vector<16x128xf32>
    %13 = arith.addf %11, %12 : vector<16x128xf32>
    %14 = arith.truncf %13 : vector<16x128xf32> to vector<16x128xbf16>
    %cst_11 = arith.constant 0.000000e+00 : bf16
    %15 = vector.broadcast %cst_11 : bf16 to vector<16x128xbf16>
    %16 = arith.maximumf %14, %15 : vector<16x128xbf16>
    %c0_12 = arith.constant 0 : index
    %c0_13 = arith.constant 0 : index
    %17 = vector.load %arg6[%c0_12, %c0_13] : memref<128x128xbf16, #tpu.memory_space<vmem>>, vector<128x128xbf16>
    %c0_14 = arith.constant 0 : index
    %c0_15 = arith.constant 0 : index
    %18 = vector.load %arg7[%c0_14, %c0_15] : memref<1x128xf32, #tpu.memory_space<vmem>>, vector<1x128xf32>
    %cst_16 = arith.constant dense<0.000000e+00> : vector<16x128xf32>
    %19 = tpu.matmul %16, %17, %cst_16 {dimension_numbers = #tpu.dot_dimension_numbers<[1], [0], [0], [1], [0, 0, 1, 1], [], []>} : vector<16x128xbf16>, vector<128x128xbf16>, vector<16x128xf32> -> vector<16x128xf32>
    %20 = vector.broadcast %18 : vector<1x128xf32> to vector<16x128xf32>
    %21 = arith.addf %19, %20 : vector<16x128xf32>
    %c0_17 = arith.constant 0 : index
    %c0_18 = arith.constant 0 : index
    %22 = vector.load %arg8[%c0_17, %c0_18] : memref<16x128xf32, #tpu.memory_space<vmem>>, vector<16x128xf32>
    tpu.vector_store %arg8[%c0_17, %c0_18], %21 {strides = array<i32>} : memref<16x128xf32, #tpu.memory_space<vmem>>, vector<16x128xf32>,
    return
  }
  func.func @transform_0(%arg0: i32) -> (i32, i32) {
    %c0_i32 = arith.constant 0 : i32
    %c0_i32_0 = arith.constant 0 : i32
    return %arg0, %c0_i32 : i32, i32
  }
  func.func @transform_1(%arg0: i32) -> (i32, i32) {
    %c0_i32 = arith.constant 0 : i32
    %c0_i32_0 = arith.constant 0 : i32
    %c0_i32_1 = arith.constant 0 : i32
    return %c0_i32, %c0_i32_0 : i32, i32
  }
  func.func @transform_2(%arg0: i32) -> (i32, i32) {
    %c0_i32 = arith.constant 0 : i32
    %c0_i32_0 = arith.constant 0 : i32
    %c0_i32_1 = arith.constant 0 : i32
    return %c0_i32, %c0_i32_0 : i32, i32
  }
  func.func @transform_3(%arg0: i32) -> (i32, i32) {
    %c0_i32 = arith.constant 0 : i32
    %c0_i32_0 = arith.constant 0 : i32
    %c0_i32_1 = arith.constant 0 : i32
    return %c0_i32, %c0_i32_0 : i32, i32
  }
  func.func @transform_4(%arg0: i32) -> (i32, i32) {
    %c0_i32 = arith.constant 0 : i32
    %c0_i32_0 = arith.constant 0 : i32
    %c0_i32_1 = arith.constant 0 : i32
    return %c0_i32, %c0_i32_0 : i32, i32
  }
  func.func @transform_5(%arg0: i32) -> (i32, i32) {
    %c0_i32 = arith.constant 0 : i32
    %c0_i32_0 = arith.constant 0 : i32
    %c0_i32_1 = arith.constant 0 : i32
    return %c0_i32, %c0_i32_0 : i32, i32
  }
  func.func @transform_6(%arg0: i32) -> (i32, i32) {
    %c0_i32 = arith.constant 0 : i32
    %c0_i32_0 = arith.constant 0 : i32
    %c0_i32_1 = arith.constant 0 : i32
    return %c0_i32, %c0_i32_0 : i32, i32
  }
  func.func @transform_7(%arg0: i32) -> (i32, i32) {
    %c0_i32 = arith.constant 0 : i32
    %c0_i32_0 = arith.constant 0 : i32
    return %arg0, %c0_i32 : i32, i32
  }
}

module attributes {stable_mosaic.version = 11 : i64} {
  func.func @_mlp_kernel(%arg0: i32, %arg1: memref<16x128xbf16, #tpu.memory_space<vmem>>, %arg2: memref<128x128xbf16, #tpu.memory_space<vmem>>, %arg3: memref<1x128xf32, #tpu.memory_space<vmem>>, %arg4: memref<128x128xbf16, #tpu.memory_space<vmem>>, %arg5: memref<1x128xf32, #tpu.memory_space<vmem>>, %arg6: memref<128x128xbf16, #tpu.memory_space<vmem>>, %arg7: memref<1x128xf32, #tpu.memory_space<vmem>>, %arg8: memref<16x128xf32, #tpu.memory_space<vmem>>) attributes {dimension_semantics = [#tpu.dimension_semantics<parallel>], iteration_bounds = array<i64: 1>, scalar_prefetch = 0 : i64, scratch_operands = 0 : i64, tpu.core_type = #tpu.core_type<tc>, window_params = [{transform_indices = @transform_0, window_bounds = array<i64: 16, 128>}, {pipeline_mode = #tpu.pipeline_mode<synchronous>, transform_indices = @transform_1, window_bounds = array<i64: 128, 128>}, {pipeline_mode = #tpu.pipeline_mode<synchronous>, transform_indices = @transform_2, window_bounds = array<i64: 1, 128>}, {pipeline_mode = #tpu.pipeline_mode<synchronous>, transform_indices = @transform_3, window_bounds = array<i64: 128, 128>}, {pipeline_mode = #tpu.pipeline_mode<synchronous>, transform_indices = @transform_4, window_bounds = array<i64: 1, 128>}, {pipeline_mode = #tpu.pipeline_mode<synchronous>, transform_indices = @transform_5, window_bounds = array<i64: 128, 128>}, {pipeline_mode = #tpu.pipeline_mode<synchronous>, transform_indices = @transform_6, window_bounds = array<i64: 1, 128>}, {transform_indices = @transform_7, window_bounds = array<i64: 16, 128>}]} {
    %c0 = arith.constant 0 : index
    %c0_0 = arith.constant 0 : index
    %0 = vector.load %arg1[%c0, %c0_0] : memref<16x128xbf16, #tpu.memory_space<vmem>>, vector<16x128xbf16>
    %c0_1 = arith.constant 0 : index
    %c0_2 = arith.constant 0 : index
    %1 = vector.load %arg2[%c0_1, %c0_2] : memref<128x128xbf16, #tpu.memory_space<vmem>>, vector<128x128xbf16>
    %c0_3 = arith.constant 0 : index
    %c0_4 = arith.constant 0 : index
    %2 = vector.load %arg3[%c0_3, %c0_4] : memref<1x128xf32, #tpu.memory_space<vmem>>, vector<1x128xf32>
    %cst = arith.constant dense<0.000000e+00> : vector<16x128xf32>
    %3 = tpu.matmul %0, %1, %cst {dimension_numbers = #tpu.dot_dimension_numbers<[1], [0], [0], [1], [0, 0, 1, 1], [], []>} : vector<16x128xbf16>, vector<128x128xbf16>, vector<16x128xf32> -> vector<16x128xf32>
    %4 = vector.broadcast %2 : vector<1x128xf32> to vector<16x128xf32>
    %5 = arith.addf %3, %4 : vector<16x128xf32>
    %6 = arith.truncf %5 : vector<16x128xf32> to vector<16x128xbf16>
    %cst_5 = arith.constant 0.000000e+00 : bf16
    %7 = vector.broadcast %cst_5 : bf16 to vector<16x128xbf16>
    %8 = arith.maximumf %6, %7 : vector<16x128xbf16>
    %c0_6 = arith.constant 0 : index
    %c0_7 = arith.constant 0 : index
    %9 = vector.load %arg4[%c0_6, %c0_7] : memref<128x128xbf16, #tpu.memory_space<vmem>>, vector<128x128xbf16>
    %c0_8 = arith.constant 0 : index
    %c0_9 = arith.constant 0 : index
    %10 = vector.load %arg5[%c0_8, %c0_9] : memref<1x128xf32, #tpu.memory_space<vmem>>, vector<1x128xf32>
    %cst_10 = arith.constant dense<0.000000e+00> : vector<16x128xf32>
    %11 = tpu.matmul %8, %9, %cst_10 {dimension_numbers = #tpu.dot_dimension_numbers<[1], [0], [0], [1], [0, 0, 1, 1], [], []>} : vector<16x128xbf16>, vector<128x128xbf16>, vector<16x128xf32> -> vector<16x128xf32>
    %12 = vector.broadcast %10 : vector<1x128xf32> to vector<16x128xf32>
    %13 = arith.addf %11, %12 : vector<16x128xf32>
    %14 = arith.truncf %13 : vector<16x128xf32> to vector<16x128xbf16>
    %cst_11 = arith.constant 0.000000e+00 : bf16
    %15 = vector.broadcast %cst_11 : bf16 to vector<16x128xbf16>
    %16 = arith.maximumf %14, %15 : vector<16x128xbf16>
    %c0_12 = arith.constant 0 : index
    %c0_13 = arith.constant 0 : index
    %17 = vector.load %arg6[%c0_12, %c0_13] : memref<128x128xbf16, #tpu.memory_space<vmem>>, vector<128x128xbf16>
    %c0_14 = arith.constant 0 : index
    %c0_15 = arith.constant 0 : index
    %18 = vector.load %arg7[%c0_14, %c0_15] : memref<1x128xf32, #tpu.memory_space<vmem>>, vector<1x128xf32>
    %cst_16 = arith.constant dense<0.000000e+00> : vector<16x128xf32>
    %19 = tpu.matmul %16, %17, %cst_16 {dimension_numbers = #tpu.dot_dimension_numbers<[1], [0], [0], [1], [0, 0, 1, 1], [], []>} : vector<16x128xbf16>, vector<128x128xbf16>, vector<16x128xf32> -> vector<16x128xf32>
    %20 = vector.broadcast %18 : vector<1x128xf32> to vector<16x128xf32>
    %21 = arith.addf %19, %20 : vector<16x128xf32>
    %c0_17 = arith.constant 0 : index
    %c0_18 = arith.constant 0 : index
    %22 = vector.load %arg8[%c0_17, %c0_18] : memref<16x128xf32, #tpu.memory_space<vmem>>, vector<16x128xf32>
    tpu.vector_store %arg8[%c0_17, %c0_18], %21 {strides = array<i32>} : memref<16x128xf32, #tpu.memory_space<vmem>>, vector<16x128xf32>,
    return
  }
  func.func @transform_0(%arg0: i32) -> (i32, i32) {
    %c0_i32 = arith.constant 0 : i32
    %c0_i32_0 = arith.constant 0 : i32
    return %arg0, %c0_i32 : i32, i32
  }
  func.func @transform_1(%arg0: i32) -> (i32, i32) {
    %c0_i32 = arith.constant 0 : i32
    %c0_i32_0 = arith.constant 0 : i32
    %c0_i32_1 = arith.constant 0 : i32
    return %c0_i32, %c0_i32_0 : i32, i32
  }
  func.func @transform_2(%arg0: i32) -> (i32, i32) {
    %c0_i32 = arith.constant 0 : i32
    %c0_i32_0 = arith.constant 0 : i32
    %c0_i32_1 = arith.constant 0 : i32
    return %c0_i32, %c0_i32_0 : i32, i32
  }
  func.func @transform_3(%arg0: i32) -> (i32, i32) {
    %c0_i32 = arith.constant 0 : i32
    %c0_i32_0 = arith.constant 0 : i32
    %c0_i32_1 = arith.constant 0 : i32
    return %c0_i32, %c0_i32_0 : i32, i32
  }
  func.func @transform_4(%arg0: i32) -> (i32, i32) {
    %c0_i32 = arith.constant 0 : i32
    %c0_i32_0 = arith.constant 0 : i32
    %c0_i32_1 = arith.constant 0 : i32
    return %c0_i32, %c0_i32_0 : i32, i32
  }
  func.func @transform_5(%arg0: i32) -> (i32, i32) {
    %c0_i32 = arith.constant 0 : i32
    %c0_i32_0 = arith.constant 0 : i32
    %c0_i32_1 = arith.constant 0 : i32
    return %c0_i32, %c0_i32_0 : i32, i32
  }
  func.func @transform_6(%arg0: i32) -> (i32, i32) {
    %c0_i32 = arith.constant 0 : i32
    %c0_i32_0 = arith.constant 0 : i32
    %c0_i32_1 = arith.constant 0 : i32
    return %c0_i32, %c0_i32_0 : i32, i32
  }
  func.func @transform_7(%arg0: i32) -> (i32, i32) {
    %c0_i32 = arith.constant 0 : i32
    %c0_i32_0 = arith.constant 0 : i32
    return %arg0, %c0_i32 : i32, i32
  }
}

</mosaic_0001>

<llo_original>
// kernel: tpu_custom_call.1
$region0: #{tpu_custom_call.1}
  #allocation0 [shape = 'u32[]', space=smem, size = 0x4, offset = 0x4, fixed_abs, tag = 'smem constant byte address 0x4 - core index']
  #allocation1 [shape = 'u32[72,128]{1,0:T(1,128)}', space=vmem, size = 0x9000, scoped, tag = 'internal scratch']
  %s0 = inlined_call_operand.hbm [shape: bf16[16,128], index: 0, kind: input, shape index: {}]
  %s1 = inlined_call_operand.hbm [shape: bf16[128,128], index: 1, kind: input, shape index: {}]
  %s2 = inlined_call_operand.vmem [shape: f32[1,128], index: 2, kind: input, shape index: {}]
  %s3 = inlined_call_operand.hbm [shape: bf16[128,128], index: 3, kind: input, shape index: {}]
  %s4 = inlined_call_operand.vmem [shape: f32[1,128], index: 4, kind: input, shape index: {}]
  %s5 = inlined_call_operand.hbm [shape: bf16[128,128], index: 5, kind: input, shape index: {}]
  %s6 = inlined_call_operand.vmem [shape: f32[1,128], index: 6, kind: input, shape index: {}]
  %s7 = inlined_call_operand.hbm [shape: f32[16,128], index: 7, kind: output, shape index: {}]
  %s8 = sld [smem:[#allocation0]]
  $region54: #{tpu_custom_call.1} parent=0
    _
  %s10 = ssub.s32 1, %s8
  %s11 = scalar_select 0, %s10, %s8
  $region1: #{tpu_custom_call.1} parent=0
    #allocation2 [shape = 'u8[4096]{0}', space=vmem, size = 0x1000, scoped, tag = 'input window, operand 0, single buffered']
    #allocation3 [shape = 's32[1]{0}', space=sflag, size = 0x4, scoped, tag = 'scoped memory for tpu_custom_call.1']
    #allocation4 [shape = 's32[1]{0}', space=sflag, size = 0x4, scoped, tag = 'scoped memory for tpu_custom_call.1']
    #allocation5 [shape = 'u8[32768]{0}', space=vmem, size = 0x8000, scoped, tag = 'input window, operand 1, single buffered']
    #allocation6 [shape = 's32[1]{0}', space=sflag, size = 0x4, scoped, tag = 'scoped memory for tpu_custom_call.1']
    #allocation7 [shape = 'u8[32768]{0}', space=vmem, size = 0x8000, scoped, tag = 'input window, operand 3, single buffered']
    #allocation8 [shape = 'u8[32768]{0}', space=vmem, size = 0x8000, scoped, tag = 'input window, operand 5, single buffered']
    #allocation9 [shape = 's32[1]{0}', space=sflag, size = 0x4, scoped, tag = 'scoped memory for tpu_custom_call.1']
    #allocation10 [shape = 'u8[8192]{0}', space=vmem, size = 0x2000, scoped, tag = 'output window, operand 0, single buffered']
    %12 = vsyncpa [#allocation3], 0
    %13 = vsyncpa [#allocation6], 0
    %14 = vsyncpa [#allocation9], 0
    %15 = vsyncpa [#allocation4], 0
    // Predicated region
    $region2: #{tpu_custom_call.1} parent=1 // pred_check
      _
    $region3: #{tpu_custom_call.1} parent=1 // pred_check_branch
      %17 = sbr.rel (0) target = $region5
    $region4: #{tpu_custom_call.1} parent=1 // pred_region
      %19 = vsyncadd [#allocation3], 0
      %s20 = sshll.u32 %s0, 4
      %s21 = int_to_ptr.hbm [resolvable:$true] %s20
      %s22 = sshll.u32 [#allocation2], 4
      %s23 = int_to_ptr.vmem [resolvable:$true] %s22
      %28 = dma.hbm_to_vmem [thread:$0]  %s21, 128, %s23, [#allocation3], 64, 64, 4
    $region5: #{tpu_custom_call.1} parent=1 // pred_fallthru
      _
    // Predicated region
    $region6: #{tpu_custom_call.1} parent=1 // pred_check
      _
    $region7: #{tpu_custom_call.1} parent=1 // pred_check_branch
      %30 = sbr.rel (0) target = $region9
    $region8: #{tpu_custom_call.1} parent=1 // pred_region
      %32 = vsyncadd [#allocation6], 0
      %s33 = sshll.u32 %s1, 4
      %s34 = int_to_ptr.hbm [resolvable:$true] %s33
      %s35 = sshll.u32 [#allocation5], 4
      %s36 = int_to_ptr.vmem [resolvable:$true] %s35
      %41 = dma.hbm_to_vmem [thread:$0]  %s34, 1024, %s36, [#allocation6], 64, 64, 4
    $region9: #{tpu_custom_call.1} parent=1 // pred_fallthru
      _
    // Predicated region
    $region10: #{tpu_custom_call.1} parent=1 // pred_check
      _
    $region11: #{tpu_custom_call.1} parent=1 // pred_check_branch
      %43 = sbr.rel (0) target = $region13
    $region12: #{tpu_custom_call.1} parent=1 // pred_region
      _
    $region13: #{tpu_custom_call.1} parent=1 // pred_fallthru
      _
    // Predicated region
    $region14: #{tpu_custom_call.1} parent=1 // pred_check
      _
    $region15: #{tpu_custom_call.1} parent=1 // pred_check_branch
      %45 = sbr.rel (0) target = $region17
    $region16: #{tpu_custom_call.1} parent=1 // pred_region
      %47 = vsyncadd [#allocation6], 0
      %s48 = sshll.u32 %s3, 4
      %s49 = int_to_ptr.hbm [resolvable:$true] %s48
      %s50 = sshll.u32 [#allocation7], 4
      %s51 = int_to_ptr.vmem [resolvable:$true] %s50
      %56 = dma.hbm_to_vmem [thread:$0]  %s49, 1024, %s51, [#allocation6], 64, 64, 4
    $region17: #{tpu_custom_call.1} parent=1 // pred_fallthru
      _
    // Predicated region
    $region18: #{tpu_custom_call.1} parent=1 // pred_check
      _
    $region19: #{tpu_custom_call.1} parent=1 // pred_check_branch
      %58 = sbr.rel (0) target = $region21
    $region20: #{tpu_custom_call.1} parent=1 // pred_region
      _
    $region21: #{tpu_custom_call.1} parent=1 // pred_fallthru
      _
    // Predicated region
    $region22: #{tpu_custom_call.1} parent=1 // pred_check
      _
    $region23: #{tpu_custom_call.1} parent=1 // pred_check_branch
      %60 = sbr.rel (0) target = $region25
    $region24: #{tpu_custom_call.1} parent=1 // pred_region
      %62 = vsyncadd [#allocation9], 0
      %s63 = sshll.u32 %s5, 4
      %s64 = int_to_ptr.hbm [resolvable:$true] %s63
      %s65 = sshll.u32 [#allocation8], 4
      %s66 = int_to_ptr.vmem [resolvable:$true] %s65
      %71 = dma.hbm_to_vmem [thread:$0]  %s64, 1024, %s66, [#allocation9], 64, 64, 4
    $region25: #{tpu_custom_call.1} parent=1 // pred_fallthru
      _
    // Predicated region
    $region26: #{tpu_custom_call.1} parent=1 // pred_check
      _
    $region27: #{tpu_custom_call.1} parent=1 // pred_check_branch
      %73 = sbr.rel (0) target = $region29
    $region28: #{tpu_custom_call.1} parent=1 // pred_region
      _
    $region29: #{tpu_custom_call.1} parent=1 // pred_fallthru
      _
    // Predicated region
    $region30: #{tpu_custom_call.1} parent=1 // pred_check
      _
    $region31: #{tpu_custom_call.1} parent=1 // pred_check_branch
      %75 = sbr.rel (0) target = $region33
    $region32: #{tpu_custom_call.1} parent=1 // pred_region
      %77 = dma.done [#allocation3], 128
    $region33: #{tpu_custom_call.1} parent=1 // pred_fallthru
      _
    // Predicated region
    $region34: #{tpu_custom_call.1} parent=1 // pred_check
      _
    $region35: #{tpu_custom_call.1} parent=1 // pred_check_branch
      %79 = sbr.rel (0) target = $region37
    $region36: #{tpu_custom_call.1} parent=1 // pred_region
      %81 = dma.done [#allocation6], 1024
    $region37: #{tpu_custom_call.1} parent=1 // pred_fallthru
      _
    // Predicated region
    $region38: #{tpu_custom_call.1} parent=1 // pred_check
      _
    $region39: #{tpu_custom_call.1} parent=1 // pred_check_branch
      %83 = sbr.rel (0) target = $region41
    $region40: #{tpu_custom_call.1} parent=1 // pred_region
      %85 = dma.done [#allocation6], 1024
    $region41: #{tpu_custom_call.1} parent=1 // pred_fallthru
      _
    // Predicated region
    $region42: #{tpu_custom_call.1} parent=1 // pred_check
      _
    $region43: #{tpu_custom_call.1} parent=1 // pred_check_branch
      %87 = sbr.rel (0) target = $region45
    $region44: #{tpu_custom_call.1} parent=1 // pred_region
      %89 = dma.done [#allocation9], 1024
    $region45: #{tpu_custom_call.1} parent=1 // pred_fallthru
      _
    %v90 = vld [vmem:[#allocation2] sm:$0xf]
    %v91 = vld [vmem:[#allocation2 + $0x4] sm:$0xf]
    %v92 = vld [vmem:[#allocation5] sm:$0xf]
    %v93 = vld [vmem:[#allocation5 + $0x4] sm:$0xf]
    %v94 = vld [vmem:[#allocation5 + $0x8] sm:$0xf]
    %v95 = vld [vmem:[#allocation5 + $0xc] sm:$0xf]
    %v96 = vld [vmem:[#allocation5 + $0x10] sm:$0xf]
    %v97 = vld [vmem:[#allocation5 + $0x14] sm:$0xf]
    %v98 = vld [vmem:[#allocation5 + $0x18] sm:$0xf]
    %v99 = vld [vmem:[#allocation5 + $0x1c] sm:$0xf]
    %v100 = vld [vmem:[#allocation5 + $0x20] sm:$0xf]
    %v101 = vld [vmem:[#allocation5 + $0x24] sm:$0xf]
    %v102 = vld [vmem:[#allocation5 + $0x28] sm:$0xf]
    %v103 = vld [vmem:[#allocation5 + $0x2c] sm:$0xf]
    %v104 = vld [vmem:[#allocation5 + $0x30] sm:$0xf]
    %v105 = vld [vmem:[#allocation5 + $0x34] sm:$0xf]
    %v106 = vld [vmem:[#allocation5 + $0x38] sm:$0xf]
    %v107 = vld [vmem:[#allocation5 + $0x3c] sm:$0xf]
    %v108 = vld [vmem:[%s2] sm:$0x1]
    %v110 = vperm.slane %v108, 0
    %v114 = vunpack.c.l.b16 %v90
    %v115 = vunpack.c.l.b16 %v91
    %v116 = vpack.c.b16 %v115, %v114
    %v134 = vunpack.c.l.b16 %v92
    %v135 = vunpack.c.l.b16 %v93
    %v136 = vunpack.c.l.b16 %v94
    %v137 = vunpack.c.l.b16 %v95
    %v138 = vunpack.c.l.b16 %v96
    %v139 = vunpack.c.l.b16 %v97
    %v140 = vunpack.c.l.b16 %v98
    %v141 = vunpack.c.l.b16 %v99
    %v142 = vunpack.c.l.b16 %v100
    %v143 = vunpack.c.l.b16 %v101
    %v144 = vunpack.c.l.b16 %v102
    %v145 = vunpack.c.l.b16 %v103
    %v146 = vunpack.c.l.b16 %v104
    %v147 = vunpack.c.l.b16 %v105
    %v148 = vunpack.c.l.b16 %v106
    %v149 = vunpack.c.l.b16 %v107
    %v150 = vpack.c.b16 %v135, %v134
    %v151 = vpack.c.b16 %v137, %v136
    %v152 = vpack.c.b16 %v139, %v138
    %v153 = vpack.c.b16 %v141, %v140
    %v154 = vpack.c.b16 %v143, %v142
    %v155 = vpack.c.b16 %v145, %v144
    %v156 = vpack.c.b16 %v147, %v146
    %v157 = vpack.c.b16 %v149, %v148
    %166 = vmatpush.bf16.msra.mxu0 %v157
    %167 = vmatpush.bf16.msra.mxu0 %v156
    %168 = vmatpush.bf16.msra.mxu0 %v155
    %169 = vmatpush.bf16.msra.mxu0 %v154
    %170 = vmatpush.bf16.msra.mxu0 %v153
    %171 = vmatpush.bf16.msra.mxu0 %v152
    %172 = vmatpush.bf16.msra.mxu0 %v151
    %173 = vmatpush.bf16.msra.mxu0 %v150
    %174 = vmatmul.bf16.gmra.mxu0 %v116
    %v175 = vpop.f32.mrf.mxu0
    %v176 = vadd.f32 %v110, %v175
    %v177 = vpop.f32.mrf.mxu0
    %v178 = vadd.f32 %v110, %v177
    %179 = vdwg.mxu0
    %v180 = vpack.c.bf16 %v176, %v176
    %v181 = vpack.c.bf16 %v178, %v178
    %v182 = vunpack.c.l.bf16 %v180
    %v183 = vunpack.c.l.bf16 %v181
    %v184 = vmax.f32 %v182, 0.0
    %v185 = vmax.f32 %v183, 0.0
    %v186 = vpack.c.bf16 %v185, %v184
    %v187 = vld [vmem:[#allocation7] sm:$0xf]
    %v188 = vld [vmem:[#allocation7 + $0x4] sm:$0xf]
    %v189 = vld [vmem:[#allocation7 + $0x8] sm:$0xf]
    %v190 = vld [vmem:[#allocation7 + $0xc] sm:$0xf]
    %v191 = vld [vmem:[#allocation7 + $0x10] sm:$0xf]
    %v192 = vld [vmem:[#allocation7 + $0x14] sm:$0xf]
    %v193 = vld [vmem:[#allocation7 + $0x18] sm:$0xf]
    %v194 = vld [vmem:[#allocation7 + $0x1c] sm:$0xf]
    %v195 = vld [vmem:[#allocation7 + $0x20] sm:$0xf]
    %v196 = vld [vmem:[#allocation7 + $0x24] sm:$0xf]
    %v197 = vld [vmem:[#allocation7 + $0x28] sm:$0xf]
    %v198 = vld [vmem:[#allocation7 + $0x2c] sm:$0xf]
    %v199 = vld [vmem:[#allocation7 + $0x30] sm:$0xf]
    %v200 = vld [vmem:[#allocation7 + $0x34] sm:$0xf]
    %v201 = vld [vmem:[#allocation7 + $0x38] sm:$0xf]
    %v202 = vld [vmem:[#allocation7 + $0x3c] sm:$0xf]
    %v203 = vld [vmem:[%s4] sm:$0x1]
    %v205 = vperm.slane %v203, 0
    %v223 = vunpack.c.l.b16 %v187
    %v224 = vunpack.c.l.b16 %v188
    %v225 = vunpack.c.l.b16 %v189
    %v226 = vunpack.c.l.b16 %v190
    %v227 = vunpack.c.l.b16 %v191
    %v228 = vunpack.c.l.b16 %v192
    %v229 = vunpack.c.l.b16 %v193
    %v230 = vunpack.c.l.b16 %v194
    %v231 = vunpack.c.l.b16 %v195
    %v232 = vunpack.c.l.b16 %v196
    %v233 = vunpack.c.l.b16 %v197
    %v234 = vunpack.c.l.b16 %v198
    %v235 = vunpack.c.l.b16 %v199
    %v236 = vunpack.c.l.b16 %v200
    %v237 = vunpack.c.l.b16 %v201
    %v238 = vunpack.c.l.b16 %v202
    %v239 = vpack.c.b16 %v224, %v223
    %v240 = vpack.c.b16 %v226, %v225
    %v241 = vpack.c.b16 %v228, %v227
    %v242 = vpack.c.b16 %v230, %v229
    %v243 = vpack.c.b16 %v232, %v231
    %v244 = vpack.c.b16 %v234, %v233
    %v245 = vpack.c.b16 %v236, %v235
    %v246 = vpack.c.b16 %v238, %v237
    %255 = vmatpush.bf16.msra.mxu0 %v246
    %256 = vmatpush.bf16.msra.mxu0 %v245
    %257 = vmatpush.bf16.msra.mxu0 %v244
    %258 = vmatpush.bf16.msra.mxu0 %v243
    %259 = vmatpush.bf16.msra.mxu0 %v242
    %260 = vmatpush.bf16.msra.mxu0 %v241
    %261 = vmatpush.bf16.msra.mxu0 %v240
    %262 = vmatpush.bf16.msra.mxu0 %v239
    %263 = vmatmul.bf16.gmra.mxu0 %v186
    %v264 = vpop.f32.mrf.mxu0
    %v265 = vadd.f32 %v205, %v264
    %v266 = vpop.f32.mrf.mxu0
    %v267 = vadd.f32 %v205, %v266
    %268 = vdwg.mxu0
    %v269 = vpack.c.bf16 %v265, %v265
    %v270 = vpack.c.bf16 %v267, %v267
    %v271 = vunpack.c.l.bf16 %v269
    %v272 = vunpack.c.l.bf16 %v270
    %v273 = vmax.f32 %v271, 0.0
    %v274 = vmax.f32 %v272, 0.0
    %v275 = vpack.c.bf16 %v274, %v273
    %v276 = vld [vmem:[#allocation8] sm:$0xf]
    %v277 = vld [vmem:[#allocation8 + $0x4] sm:$0xf]
    %v278 = vld [vmem:[#allocation8 + $0x8] sm:$0xf]
    %v279 = vld [vmem:[#allocation8 + $0xc] sm:$0xf]
    %v280 = vld [vmem:[#allocation8 + $0x10] sm:$0xf]
    %v281 = vld [vmem:[#allocation8 + $0x14] sm:$0xf]
    %v282 = vld [vmem:[#allocation8 + $0x18] sm:$0xf]
    %v283 = vld [vmem:[#allocation8 + $0x1c] sm:$0xf]
    %v284 = vld [vmem:[#allocation8 + $0x20] sm:$0xf]
    %v285 = vld [vmem:[#allocation8 + $0x24] sm:$0xf]
    %v286 = vld [vmem:[#allocation8 + $0x28] sm:$0xf]
    %v287 = vld [vmem:[#allocation8 + $0x2c] sm:$0xf]
    %v288 = vld [vmem:[#allocation8 + $0x30] sm:$0xf]
    %v289 = vld [vmem:[#allocation8 + $0x34] sm:$0xf]
    %v290 = vld [vmem:[#allocation8 + $0x38] sm:$0xf]
    %v291 = vld [vmem:[#allocation8 + $0x3c] sm:$0xf]
    %v292 = vld [vmem:[%s6] sm:$0x1]
    %v294 = vperm.slane %v292, 0
    %v312 = vunpack.c.l.b16 %v276
    %v313 = vunpack.c.l.b16 %v277
    %v314 = vunpack.c.l.b16 %v278
    %v315 = vunpack.c.l.b16 %v279
    %v316 = vunpack.c.l.b16 %v280
    %v317 = vunpack.c.l.b16 %v281
    %v318 = vunpack.c.l.b16 %v282
    %v319 = vunpack.c.l.b16 %v283
    %v320 = vunpack.c.l.b16 %v284
    %v321 = vunpack.c.l.b16 %v285
    %v322 = vunpack.c.l.b16 %v286
    %v323 = vunpack.c.l.b16 %v287
    %v324 = vunpack.c.l.b16 %v288
    %v325 = vunpack.c.l.b16 %v289
    %v326 = vunpack.c.l.b16 %v290
    %v327 = vunpack.c.l.b16 %v291
    %v328 = vpack.c.b16 %v313, %v312
    %v329 = vpack.c.b16 %v315, %v314
    %v330 = vpack.c.b16 %v317, %v316
    %v331 = vpack.c.b16 %v319, %v318
    %v332 = vpack.c.b16 %v321, %v320
    %v333 = vpack.c.b16 %v323, %v322
    %v334 = vpack.c.b16 %v325, %v324
    %v335 = vpack.c.b16 %v327, %v326
    %344 = vmatpush.bf16.msra.mxu0 %v335
    %345 = vmatpush.bf16.msra.mxu0 %v334
    %346 = vmatpush.bf16.msra.mxu0 %v333
    %347 = vmatpush.bf16.msra.mxu0 %v332
    %348 = vmatpush.bf16.msra.mxu0 %v331
    %349 = vmatpush.bf16.msra.mxu0 %v330
    %350 = vmatpush.bf16.msra.mxu0 %v329
    %351 = vmatpush.bf16.msra.mxu0 %v328
    %352 = vmatmul.bf16.gmra.mxu0 %v275
    %v353 = vpop.f32.mrf.mxu0
    %v354 = vadd.f32 %v294, %v353
    %v355 = vpop.f32.mrf.mxu0
    %v356 = vadd.f32 %v294, %v355
    %357 = vdwg.mxu0
    %358 = vst [vmem:[#allocation10] sm:$0xff] %v354
    %359 = vst [vmem:[#allocation10 + $0x8] sm:$0xff] %v356
    // Predicated region
    $region46: #{tpu_custom_call.1} parent=1 // pred_check
      _
    $region47: #{tpu_custom_call.1} parent=1 // pred_check_branch
      %361 = sbr.rel (0) target = $region49
    $region48: #{tpu_custom_call.1} parent=1 // pred_region
      %363 = vsyncadd [#allocation4], 0
      %s364 = sshll.u32 [#allocation10], 4
      %s365 = int_to_ptr.vmem [resolvable:$true] %s364
      %s366 = sshll.u32 %s7, 4
      %s367 = int_to_ptr.hbm [resolvable:$true] %s366
      %372 = dma.vmem_to_hbm [thread:$0]  %s365, 256, %s367, [#allocation4], 128, 128, 8
    $region49: #{tpu_custom_call.1} parent=1 // pred_fallthru
      _
    // Predicated region
    $region50: #{tpu_custom_call.1} parent=1 // pred_check
      _
    $region51: #{tpu_custom_call.1} parent=1 // pred_check_branch
      %374 = sbr.rel (0) target = $region53
    $region52: #{tpu_custom_call.1} parent=1 // pred_region
      %376 = dma.done [#allocation4], 256
    $region53: #{tpu_custom_call.1} parent=1 // pred_fallthru
      _
    %377 = vsyncpa [#allocation3], 1
    %378 = vsyncpa [#allocation6], 1
    %379 = vsyncpa [#allocation9], 1
    %380 = vsyncpa [#allocation4], 1

// kernel: tpu_custom_call.1
$region0: #{tpu_custom_call.1}
  #allocation0 [shape = 'u32[]', space=smem, size = 0x4, offset = 0x4, fixed_abs, tag = 'smem constant byte address 0x4 - core index']
  #allocation1 [shape = 'u32[72,128]{1,0:T(1,128)}', space=vmem, size = 0x9000, scoped, tag = 'internal scratch']
  %s0 = inlined_call_operand.hbm [shape: bf16[16,128], index: 0, kind: input, shape index: {}]
  %s1 = inlined_call_operand.hbm [shape: bf16[128,128], index: 1, kind: input, shape index: {}]
  %s2 = inlined_call_operand.vmem [shape: f32[1,128], index: 2, kind: input, shape index: {}]
  %s3 = inlined_call_operand.hbm [shape: bf16[128,128], index: 3, kind: input, shape index: {}]
  %s4 = inlined_call_operand.vmem [shape: f32[1,128], index: 4, kind: input, shape index: {}]
  %s5 = inlined_call_operand.hbm [shape: bf16[128,128], index: 5, kind: input, shape index: {}]
  %s6 = inlined_call_operand.vmem [shape: f32[1,128], index: 6, kind: input, shape index: {}]
  %s7 = inlined_call_operand.hbm [shape: f32[16,128], index: 7, kind: output, shape index: {}]
  %s8 = sld [smem:[#allocation0]]
  $region54: #{tpu_custom_call.1} parent=0
    _
  %s10 = ssub.s32 1, %s8
  %s11 = scalar_select 0, %s10, %s8
  $region1: #{tpu_custom_call.1} parent=0
    #allocation2 [shape = 'u8[4096]{0}', space=vmem, size = 0x1000, scoped, tag = 'input window, operand 0, single buffered']
    #allocation3 [shape = 's32[1]{0}', space=sflag, size = 0x4, scoped, tag = 'scoped memory for tpu_custom_call.1']
    #allocation4 [shape = 's32[1]{0}', space=sflag, size = 0x4, scoped, tag = 'scoped memory for tpu_custom_call.1']
    #allocation5 [shape = 'u8[32768]{0}', space=vmem, size = 0x8000, scoped, tag = 'input window, operand 1, single buffered']
    #allocation6 [shape = 's32[1]{0}', space=sflag, size = 0x4, scoped, tag = 'scoped memory for tpu_custom_call.1']
    #allocation7 [shape = 'u8[32768]{0}', space=vmem, size = 0x8000, scoped, tag = 'input window, operand 3, single buffered']
    #allocation8 [shape = 'u8[32768]{0}', space=vmem, size = 0x8000, scoped, tag = 'input window, operand 5, single buffered']
    #allocation9 [shape = 's32[1]{0}', space=sflag, size = 0x4, scoped, tag = 'scoped memory for tpu_custom_call.1']
    #allocation10 [shape = 'u8[8192]{0}', space=vmem, size = 0x2000, scoped, tag = 'output window, operand 0, single buffered']
    %12 = vsyncpa [#allocation3], 0
    %13 = vsyncpa [#allocation6], 0
    %14 = vsyncpa [#allocation9], 0
    %15 = vsyncpa [#allocation4], 0
    // Predicated region
    $region2: #{tpu_custom_call.1} parent=1 // pred_check
      _
    $region3: #{tpu_custom_call.1} parent=1 // pred_check_branch
      %17 = sbr.rel (0) target = $region5
    $region4: #{tpu_custom_call.1} parent=1 // pred_region
      %19 = vsyncadd [#allocation3], 0
      %s20 = sshll.u32 %s0, 4
      %s21 = int_to_ptr.hbm [resolvable:$true] %s20
      %s22 = sshll.u32 [#allocation2], 4
      %s23 = int_to_ptr.vmem [resolvable:$true] %s22
      %28 = dma.hbm_to_vmem [thread:$0]  %s21, 128, %s23, [#allocation3], 64, 64, 4
    $region5: #{tpu_custom_call.1} parent=1 // pred_fallthru
      _
    // Predicated region
    $region6: #{tpu_custom_call.1} parent=1 // pred_check
      _
    $region7: #{tpu_custom_call.1} parent=1 // pred_check_branch
      %30 = sbr.rel (0) target = $region9
    $region8: #{tpu_custom_call.1} parent=1 // pred_region
      %32 = vsyncadd [#allocation6], 0
      %s33 = sshll.u32 %s1, 4
      %s34 = int_to_ptr.hbm [resolvable:$true] %s33
      %s35 = sshll.u32 [#allocation5], 4
      %s36 = int_to_ptr.vmem [resolvable:$true] %s35
      %41 = dma.hbm_to_vmem [thread:$0]  %s34, 1024, %s36, [#allocation6], 64, 64, 4
    $region9: #{tpu_custom_call.1} parent=1 // pred_fallthru
      _
    // Predicated region
    $region10: #{tpu_custom_call.1} parent=1 // pred_check
      _
    $region11: #{tpu_custom_call.1} parent=1 // pred_check_branch
      %43 = sbr.rel (0) target = $region13
    $region12: #{tpu_custom_call.1} parent=1 // pred_region
      _
    $region13: #{tpu_custom_call.1} parent=1 // pred_fallthru
      _
    // Predicated region
    $region14: #{tpu_custom_call.1} parent=1 // pred_check
      _
    $region15: #{tpu_custom_call.1} parent=1 // pred_check_branch
      %45 = sbr.rel (0) target = $region17
    $region16: #{tpu_custom_call.1} parent=1 // pred_region
      %47 = vsyncadd [#allocation6], 0
      %s48 = sshll.u32 %s3, 4
      %s49 = int_to_ptr.hbm [resolvable:$true] %s48
      %s50 = sshll.u32 [#allocation7], 4
      %s51 = int_to_ptr.vmem [resolvable:$true] %s50
      %56 = dma.hbm_to_vmem [thread:$0]  %s49, 1024, %s51, [#allocation6], 64, 64, 4
    $region17: #{tpu_custom_call.1} parent=1 // pred_fallthru
      _
    // Predicated region
    $region18: #{tpu_custom_call.1} parent=1 // pred_check
      _
    $region19: #{tpu_custom_call.1} parent=1 // pred_check_branch
      %58 = sbr.rel (0) target = $region21
    $region20: #{tpu_custom_call.1} parent=1 // pred_region
      _
    $region21: #{tpu_custom_call.1} parent=1 // pred_fallthru
      _
    // Predicated region
    $region22: #{tpu_custom_call.1} parent=1 // pred_check
      _
    $region23: #{tpu_custom_call.1} parent=1 // pred_check_branch
      %60 = sbr.rel (0) target = $region25
    $region24: #{tpu_custom_call.1} parent=1 // pred_region
      %62 = vsyncadd [#allocation9], 0
      %s63 = sshll.u32 %s5, 4
      %s64 = int_to_ptr.hbm [resolvable:$true] %s63
      %s65 = sshll.u32 [#allocation8], 4
      %s66 = int_to_ptr.vmem [resolvable:$true] %s65
      %71 = dma.hbm_to_vmem [thread:$0]  %s64, 1024, %s66, [#allocation9], 64, 64, 4
    $region25: #{tpu_custom_call.1} parent=1 // pred_fallthru
      _
    // Predicated region
    $region26: #{tpu_custom_call.1} parent=1 // pred_check
      _
    $region27: #{tpu_custom_call.1} parent=1 // pred_check_branch
      %73 = sbr.rel (0) target = $region29
    $region28: #{tpu_custom_call.1} parent=1 // pred_region
      _
    $region29: #{tpu_custom_call.1} parent=1 // pred_fallthru
      _
    // Predicated region
    $region30: #{tpu_custom_call.1} parent=1 // pred_check
      _
    $region31: #{tpu_custom_call.1} parent=1 // pred_check_branch
      %75 = sbr.rel (0) target = $region33
    $region32: #{tpu_custom_call.1} parent=1 // pred_region
      %77 = dma.done [#allocation3], 128
    $region33: #{tpu_custom_call.1} parent=1 // pred_fallthru
      _
    // Predicated region
    $region34: #{tpu_custom_call.1} parent=1 // pred_check
      _
    $region35: #{tpu_custom_call.1} parent=1 // pred_check_branch
      %79 = sbr.rel (0) target = $region37
    $region36: #{tpu_custom_call.1} parent=1 // pred_region
      %81 = dma.done [#allocation6], 1024
    $region37: #{tpu_custom_call.1} parent=1 // pred_fallthru
      _
    // Predicated region
    $region38: #{tpu_custom_call.1} parent=1 // pred_check
      _
    $region39: #{tpu_custom_call.1} parent=1 // pred_check_branch
      %83 = sbr.rel (0) target = $region41
    $region40: #{tpu_custom_call.1} parent=1 // pred_region
      %85 = dma.done [#allocation6], 1024
    $region41: #{tpu_custom_call.1} parent=1 // pred_fallthru
      _
    // Predicated region
    $region42: #{tpu_custom_call.1} parent=1 // pred_check
      _
    $region43: #{tpu_custom_call.1} parent=1 // pred_check_branch
      %87 = sbr.rel (0) target = $region45
    $region44: #{tpu_custom_call.1} parent=1 // pred_region
      %89 = dma.done [#allocation9], 1024
    $region45: #{tpu_custom_call.1} parent=1 // pred_fallthru
      _
    %v90 = vld [vmem:[#allocation2] sm:$0xf]
    %v91 = vld [vmem:[#allocation2 + $0x4] sm:$0xf]
    %v92 = vld [vmem:[#allocation5] sm:$0xf]
    %v93 = vld [vmem:[#allocation5 + $0x4] sm:$0xf]
    %v94 = vld [vmem:[#allocation5 + $0x8] sm:$0xf]
    %v95 = vld [vmem:[#allocation5 + $0xc] sm:$0xf]
    %v96 = vld [vmem:[#allocation5 + $0x10] sm:$0xf]
    %v97 = vld [vmem:[#allocation5 + $0x14] sm:$0xf]
    %v98 = vld [vmem:[#allocation5 + $0x18] sm:$0xf]
    %v99 = vld [vmem:[#allocation5 + $0x1c] sm:$0xf]
    %v100 = vld [vmem:[#allocation5 + $0x20] sm:$0xf]
    %v101 = vld [vmem:[#allocation5 + $0x24] sm:$0xf]
    %v102 = vld [vmem:[#allocation5 + $0x28] sm:$0xf]
    %v103 = vld [vmem:[#allocation5 + $0x2c] sm:$0xf]
    %v104 = vld [vmem:[#allocation5 + $0x30] sm:$0xf]
    %v105 = vld [vmem:[#allocation5 + $0x34] sm:$0xf]
    %v106 = vld [vmem:[#allocation5 + $0x38] sm:$0xf]
    %v107 = vld [vmem:[#allocation5 + $0x3c] sm:$0xf]
    %v108 = vld [vmem:[%s2] sm:$0x1]
    %v110 = vperm.slane %v108, 0
    %v114 = vunpack.c.l.b16 %v90
    %v115 = vunpack.c.l.b16 %v91
    %v116 = vpack.c.b16 %v115, %v114
    %v134 = vunpack.c.l.b16 %v92
    %v135 = vunpack.c.l.b16 %v93
    %v136 = vunpack.c.l.b16 %v94
    %v137 = vunpack.c.l.b16 %v95
    %v138 = vunpack.c.l.b16 %v96
    %v139 = vunpack.c.l.b16 %v97
    %v140 = vunpack.c.l.b16 %v98
    %v141 = vunpack.c.l.b16 %v99
    %v142 = vunpack.c.l.b16 %v100
    %v143 = vunpack.c.l.b16 %v101
    %v144 = vunpack.c.l.b16 %v102
    %v145 = vunpack.c.l.b16 %v103
    %v146 = vunpack.c.l.b16 %v104
    %v147 = vunpack.c.l.b16 %v105
    %v148 = vunpack.c.l.b16 %v106
    %v149 = vunpack.c.l.b16 %v107
    %v150 = vpack.c.b16 %v135, %v134
    %v151 = vpack.c.b16 %v137, %v136
    %v152 = vpack.c.b16 %v139, %v138
    %v153 = vpack.c.b16 %v141, %v140
    %v154 = vpack.c.b16 %v143, %v142
    %v155 = vpack.c.b16 %v145, %v144
    %v156 = vpack.c.b16 %v147, %v146
    %v157 = vpack.c.b16 %v149, %v148
    %166 = vmatpush.bf16.msra.mxu0 %v157
    %167 = vmatpush.bf16.msra.mxu0 %v156
    %168 = vmatpush.bf16.msra.mxu0 %v155
    %169 = vmatpush.bf16.msra.mxu0 %v154
    %170 = vmatpush.bf16.msra.mxu0 %v153
    %171 = vmatpush.bf16.msra.mxu0 %v152
    %172 = vmatpush.bf16.msra.mxu0 %v151
    %173 = vmatpush.bf16.msra.mxu0 %v150
    %174 = vmatmul.bf16.gmra.mxu0 %v116
    %v175 = vpop.f32.mrf.mxu0
    %v176 = vadd.f32 %v110, %v175
    %v177 = vpop.f32.mrf.mxu0
    %v178 = vadd.f32 %v110, %v177
    %179 = vdwg.mxu0
    %v180 = vpack.c.bf16 %v176, %v176
    %v181 = vpack.c.bf16 %v178, %v178
    %v182 = vunpack.c.l.bf16 %v180
    %v183 = vunpack.c.l.bf16 %v181
    %v184 = vmax.f32 %v182, 0.0
    %v185 = vmax.f32 %v183, 0.0
    %v186 = vpack.c.bf16 %v185, %v184
    %v187 = vld [vmem:[#allocation7] sm:$0xf]
    %v188 = vld [vmem:[#allocation7 + $0x4] sm:$0xf]
    %v189 = vld [vmem:[#allocation7 + $0x8] sm:$0xf]
    %v190 = vld [vmem:[#allocation7 + $0xc] sm:$0xf]
    %v191 = vld [vmem:[#allocation7 + $0x10] sm:$0xf]
    %v192 = vld [vmem:[#allocation7 + $0x14] sm:$0xf]
    %v193 = vld [vmem:[#allocation7 + $0x18] sm:$0xf]
    %v194 = vld [vmem:[#allocation7 + $0x1c] sm:$0xf]
    %v195 = vld [vmem:[#allocation7 + $0x20] sm:$0xf]
    %v196 = vld [vmem:[#allocation7 + $0x24] sm:$0xf]
    %v197 = vld [vmem:[#allocation7 + $0x28] sm:$0xf]
    %v198 = vld [vmem:[#allocation7 + $0x2c] sm:$0xf]
    %v199 = vld [vmem:[#allocation7 + $0x30] sm:$0xf]
    %v200 = vld [vmem:[#allocation7 + $0x34] sm:$0xf]
    %v201 = vld [vmem:[#allocation7 + $0x38] sm:$0xf]
    %v202 = vld [vmem:[#allocation7 + $0x3c] sm:$0xf]
    %v203 = vld [vmem:[%s4] sm:$0x1]
    %v205 = vperm.slane %v203, 0
    %v223 = vunpack.c.l.b16 %v187
    %v224 = vunpack.c.l.b16 %v188
    %v225 = vunpack.c.l.b16 %v189
    %v226 = vunpack.c.l.b16 %v190
    %v227 = vunpack.c.l.b16 %v191
    %v228 = vunpack.c.l.b16 %v192
    %v229 = vunpack.c.l.b16 %v193
    %v230 = vunpack.c.l.b16 %v194
    %v231 = vunpack.c.l.b16 %v195
    %v232 = vunpack.c.l.b16 %v196
    %v233 = vunpack.c.l.b16 %v197
    %v234 = vunpack.c.l.b16 %v198
    %v235 = vunpack.c.l.b16 %v199
    %v236 = vunpack.c.l.b16 %v200
    %v237 = vunpack.c.l.b16 %v201
    %v238 = vunpack.c.l.b16 %v202
    %v239 = vpack.c.b16 %v224, %v223
    %v240 = vpack.c.b16 %v226, %v225
    %v241 = vpack.c.b16 %v228, %v227
    %v242 = vpack.c.b16 %v230, %v229
    %v243 = vpack.c.b16 %v232, %v231
    %v244 = vpack.c.b16 %v234, %v233
    %v245 = vpack.c.b16 %v236, %v235
    %v246 = vpack.c.b16 %v238, %v237
    %255 = vmatpush.bf16.msra.mxu0 %v246
    %256 = vmatpush.bf16.msra.mxu0 %v245
    %257 = vmatpush.bf16.msra.mxu0 %v244
    %258 = vmatpush.bf16.msra.mxu0 %v243
    %259 = vmatpush.bf16.msra.mxu0 %v242
    %260 = vmatpush.bf16.msra.mxu0 %v241
    %261 = vmatpush.bf16.msra.mxu0 %v240
    %262 = vmatpush.bf16.msra.mxu0 %v239
    %263 = vmatmul.bf16.gmra.mxu0 %v186
    %v264 = vpop.f32.mrf.mxu0
    %v265 = vadd.f32 %v205, %v264
    %v266 = vpop.f32.mrf.mxu0
    %v267 = vadd.f32 %v205, %v266
    %268 = vdwg.mxu0
    %v269 = vpack.c.bf16 %v265, %v265
    %v270 = vpack.c.bf16 %v267, %v267
    %v271 = vunpack.c.l.bf16 %v269
    %v272 = vunpack.c.l.bf16 %v270
    %v273 = vmax.f32 %v271, 0.0
    %v274 = vmax.f32 %v272, 0.0
    %v275 = vpack.c.bf16 %v274, %v273
    %v276 = vld [vmem:[#allocation8] sm:$0xf]
    %v277 = vld [vmem:[#allocation8 + $0x4] sm:$0xf]
    %v278 = vld [vmem:[#allocation8 + $0x8] sm:$0xf]
    %v279 = vld [vmem:[#allocation8 + $0xc] sm:$0xf]
    %v280 = vld [vmem:[#allocation8 + $0x10] sm:$0xf]
    %v281 = vld [vmem:[#allocation8 + $0x14] sm:$0xf]
    %v282 = vld [vmem:[#allocation8 + $0x18] sm:$0xf]
    %v283 = vld [vmem:[#allocation8 + $0x1c] sm:$0xf]
    %v284 = vld [vmem:[#allocation8 + $0x20] sm:$0xf]
    %v285 = vld [vmem:[#allocation8 + $0x24] sm:$0xf]
    %v286 = vld [vmem:[#allocation8 + $0x28] sm:$0xf]
    %v287 = vld [vmem:[#allocation8 + $0x2c] sm:$0xf]
    %v288 = vld [vmem:[#allocation8 + $0x30] sm:$0xf]
    %v289 = vld [vmem:[#allocation8 + $0x34] sm:$0xf]
    %v290 = vld [vmem:[#allocation8 + $0x38] sm:$0xf]
    %v291 = vld [vmem:[#allocation8 + $0x3c] sm:$0xf]
    %v292 = vld [vmem:[%s6] sm:$0x1]
    %v294 = vperm.slane %v292, 0
    %v312 = vunpack.c.l.b16 %v276
    %v313 = vunpack.c.l.b16 %v277
    %v314 = vunpack.c.l.b16 %v278
    %v315 = vunpack.c.l.b16 %v279
    %v316 = vunpack.c.l.b16 %v280
    %v317 = vunpack.c.l.b16 %v281
    %v318 = vunpack.c.l.b16 %v282
    %v319 = vunpack.c.l.b16 %v283
    %v320 = vunpack.c.l.b16 %v284
    %v321 = vunpack.c.l.b16 %v285
    %v322 = vunpack.c.l.b16 %v286
    %v323 = vunpack.c.l.b16 %v287
    %v324 = vunpack.c.l.b16 %v288
    %v325 = vunpack.c.l.b16 %v289
    %v326 = vunpack.c.l.b16 %v290
    %v327 = vunpack.c.l.b16 %v291
    %v328 = vpack.c.b16 %v313, %v312
    %v329 = vpack.c.b16 %v315, %v314
    %v330 = vpack.c.b16 %v317, %v316
    %v331 = vpack.c.b16 %v319, %v318
    %v332 = vpack.c.b16 %v321, %v320
    %v333 = vpack.c.b16 %v323, %v322
    %v334 = vpack.c.b16 %v325, %v324
    %v335 = vpack.c.b16 %v327, %v326
    %344 = vmatpush.bf16.msra.mxu0 %v335
    %345 = vmatpush.bf16.msra.mxu0 %v334
    %346 = vmatpush.bf16.msra.mxu0 %v333
    %347 = vmatpush.bf16.msra.mxu0 %v332
    %348 = vmatpush.bf16.msra.mxu0 %v331
    %349 = vmatpush.bf16.msra.mxu0 %v330
    %350 = vmatpush.bf16.msra.mxu0 %v329
    %351 = vmatpush.bf16.msra.mxu0 %v328
    %352 = vmatmul.bf16.gmra.mxu0 %v275
    %v353 = vpop.f32.mrf.mxu0
    %v354 = vadd.f32 %v294, %v353
    %v355 = vpop.f32.mrf.mxu0
    %v356 = vadd.f32 %v294, %v355
    %357 = vdwg.mxu0
    %358 = vst [vmem:[#allocation10] sm:$0xff] %v354
    %359 = vst [vmem:[#allocation10 + $0x8] sm:$0xff] %v356
    // Predicated region
    $region46: #{tpu_custom_call.1} parent=1 // pred_check
      _
    $region47: #{tpu_custom_call.1} parent=1 // pred_check_branch
      %361 = sbr.rel (0) target = $region49
    $region48: #{tpu_custom_call.1} parent=1 // pred_region
      %363 = vsyncadd [#allocation4], 0
      %s364 = sshll.u32 [#allocation10], 4
      %s365 = int_to_ptr.vmem [resolvable:$true] %s364
      %s366 = sshll.u32 %s7, 4
      %s367 = int_to_ptr.hbm [resolvable:$true] %s366
      %372 = dma.vmem_to_hbm [thread:$0]  %s365, 256, %s367, [#allocation4], 128, 128, 8
    $region49: #{tpu_custom_call.1} parent=1 // pred_fallthru
      _
    // Predicated region
    $region50: #{tpu_custom_call.1} parent=1 // pred_check
      _
    $region51: #{tpu_custom_call.1} parent=1 // pred_check_branch
      %374 = sbr.rel (0) target = $region53
    $region52: #{tpu_custom_call.1} parent=1 // pred_region
      %376 = dma.done [#allocation4], 256
    $region53: #{tpu_custom_call.1} parent=1 // pred_fallthru
      _
    %377 = vsyncpa [#allocation3], 1
    %378 = vsyncpa [#allocation6], 1
    %379 = vsyncpa [#allocation9], 1
    %380 = vsyncpa [#allocation4], 1

</llo_original>
